<compile_context>
chip_gen: v7x
topology: tpu7x:2x2x1
jax: 0.10.0
libtpu: 0.0.40
codegen_flags: <defaults>
</compile_context>

<pallas_src>
import functools

import jax
import jax.numpy as jnp
from jax.experimental import pallas as pl
from jax.experimental.pallas import tpu as pltpu

LANE = 128          # vreg lane width
MAX_TILE_ROWS = 2048  # (2048, 128) f32 = 1 MiB per input per pipeline buffer
NUM_SLICES = 2      # split row range across (up to) 2 TensorCores (v7x)


def _dice_partials_kernel(x_ref, y_ref, part_ref, *,
                          total, tile_rows, tiles_per_slice):
    """Accumulate [sum(sig(x)*y), sum(sig(x)), sum(y)] per core-slice.

    part_ref: (1, 3, 8, LANE) f32 — resident accumulator across the inner
    ("arbitrary") grid axis; one slot per core-slice.
    """
    c = pl.program_id(0)   # core-slice axis ("parallel")
    t = pl.program_id(1)   # row-tile within slice ("arbitrary" / reduction)

    @pl.when(t == 0)
    def _():
        part_ref[...] = jnp.zeros_like(part_ref)

    # Global flat element index of every element of this tile.  Everything at
    # or beyond `total` (lane padding, partial edge tiles, overhang/duplicate
    # tiles of the second slice) is masked to contribute exactly zero.
    block = c * tiles_per_slice + t
    row0 = block * tile_rows
    row_idx = jax.lax.broadcasted_iota(jnp.int32, (tile_rows, LANE), 0) + row0
    col_idx = jax.lax.broadcasted_iota(jnp.int32, (tile_rows, LANE), 1)
    valid = (row_idx * LANE + col_idx) < total

    # Upcast inside the kernel (free VPU work); sigmoid goes to the EUP.
    x = jax.nn.sigmoid(x_ref[...].astype(jnp.float32))
    y = y_ref[...].astype(jnp.float32)
    x = jnp.where(valid, x, 0.0)
    y = jnp.where(valid, y, 0.0)

    # Pure-VPU partial reduction: fold the (tile_rows, LANE) tile down to one
    # (8, LANE) vreg-shaped accumulator per quantity (no per-step XLU reduce,
    # no SMEM read-modify-write).  tile_rows is always a multiple of 8.
    def fold(v):
        return jnp.sum(v.reshape(tile_rows // 8, 8, LANE), axis=0)

    part_ref[0, 0] += fold(x * y)
    part_ref[0, 1] += fold(x)
    part_ref[0, 2] += fold(y)


def dice_loss(y_pred, y_true):
    """Pallas equivalent of DiceLoss_pt.forward(y_pred, y_true)."""
    assert y_pred.shape == y_true.shape
    num = y_pred.shape[0]
    total = y_pred.size

    # Stream native dtype; flatten row-major (free reshape, no copy).
    xp = jnp.ravel(y_pred)
    yt = jnp.ravel(y_true)

    # Only pad when the element count is not lane-aligned (rare for NCHW
    # segmentation shapes).  Padding values are irrelevant — the kernel masks
    # on the true element count.
    if total % LANE:
        pad = LANE - total % LANE
        xp = jnp.pad(xp, (0, pad))
        yt = jnp.pad(yt, (0, pad))

    rows = xp.shape[0] // LANE
    xp = xp.reshape(rows, LANE)
    yt = yt.reshape(rows, LANE)

    # Big, sublane-aligned row tiles; never larger than the array.
    tile_rows = max(8, min(MAX_TILE_ROWS, (rows // 8) * 8))
    num_tiles = -(-rows // tile_rows)
    num_slices = NUM_SLICES if num_tiles >= NUM_SLICES else 1
    tiles_per_slice = -(-num_tiles // num_slices)

    def in_map(c, t):
        # Clamp so overhang iterations of the last slice never address past
        # the array; their contribution is masked to zero inside the kernel.
        return (jnp.minimum(c * tiles_per_slice + t, num_tiles - 1), 0)

    kernel = functools.partial(
        _dice_partials_kernel,
        total=total, tile_rows=tile_rows, tiles_per_slice=tiles_per_slice)

    partials = pl.pallas_call(
        kernel,
        out_shape=jax.ShapeDtypeStruct((num_slices, 3, 8, LANE), jnp.float32),
        grid_spec=pltpu.PrefetchScalarGridSpec(
            num_scalar_prefetch=0,
            grid=(num_slices, tiles_per_slice),
            in_specs=[
                pl.BlockSpec((tile_rows, LANE), in_map),
                pl.BlockSpec((tile_rows, LANE), in_map),
            ],
            out_specs=pl.BlockSpec((1, 3, 8, LANE), lambda c, t: (c, 0, 0, 0)),
        ),
        compiler_params=pltpu.CompilerParams(
            dimension_semantics=("parallel", "arbitrary")),
    )(xp, yt)

    # Tiny scalar epilogue on the (num_slices, 3, 8, 128) partials.
    sums = jnp.sum(partials, axis=(0, 2, 3), dtype=jnp.float32)
    smooth = jnp.float32(1.0)
    score = (2.0 * sums[0] + smooth) / (sums[1] + sums[2] + smooth)
    return 1.0 - score / jnp.float32(num)


def dice_loss_ref(y_pred, y_true):
    """Pure-JAX reference matching the PyTorch module exactly."""
    smooth = 1.0
    num = y_pred.shape[0]
    x = jax.nn.sigmoid(y_pred).reshape(num, -1).astype(jnp.float32)
    y = y_true.reshape(num, -1).astype(jnp.float32)
    intersection = jnp.sum(x * y)
    score = (2.0 * intersection + smooth) / (jnp.sum(x) + jnp.sum(y) + smooth)
    return 1.0 - jnp.sum(score) / num


if __name__ == "__main__":
    key = jax.random.PRNGKey(0)
    k1, k2 = jax.random.split(key)
    # DiceLoss has no parameters; NCHW inputs consistent with a segmentation head.
    y_pred = jax.random.normal(k1, (2, 4, 16, 16), dtype=jnp.float32)   # logits
    y_true = jax.random.bernoulli(k2, 0.3, (2, 4, 16, 16)).astype(jnp.float32)

    out = jax.block_until_ready(dice_loss(y_pred, y_true))
    ref = jax.block_until_ready(dice_loss_ref(y_pred, y_true))

    assert jnp.allclose(out, ref, rtol=1e-5, atol=1e-5), (out, ref)
    print("KERNEL_OK")
</pallas_src>

<mosaic_0001>
module attributes {stable_mosaic.version = 11 : i64} {
  func.func @_dice_partials_kernel(%arg0: i32, %arg1: i32, %arg2: memref<16x128xf32, #tpu.memory_space<vmem>>, %arg3: memref<16x128xf32, #tpu.memory_space<vmem>>, %arg4: memref<1x3x8x128xf32, #tpu.memory_space<vmem>>) attributes {dimension_semantics = [#tpu.dimension_semantics<parallel>, #tpu.dimension_semantics<arbitrary>], iteration_bounds = array<i64: 1, 1>, scalar_prefetch = 0 : i64, scratch_operands = 0 : i64, tpu.core_type = #tpu.core_type<tc>, window_params = [{transform_indices = @transform_0, window_bounds = array<i64: 16, 128>}, {transform_indices = @transform_1, window_bounds = array<i64: 16, 128>}, {transform_indices = @transform_2, window_bounds = array<i64: 1, 3, 8, 128>}]} {
    %c0_i32 = arith.constant 0 : i32
    %0 = arith.cmpi eq, %arg1, %c0_i32 : i32
    %1 = arith.extui %0 : i1 to i32
    %c0_i32_0 = arith.constant 0 : i32
    %2 = arith.cmpi ne, %1, %c0_i32_0 : i32
    scf.if %2 {
      %cst_31 = arith.constant 0.000000e+00 : f32
      %51 = vector.broadcast %cst_31 : f32 to vector<1x3x8x128xf32>
      %c0_32 = arith.constant 0 : index
      %c0_33 = arith.constant 0 : index
      %c0_34 = arith.constant 0 : index
      %c0_35 = arith.constant 0 : index
      %52 = vector.load %arg4[%c0_32, %c0_33, %c0_34, %c0_35] : memref<1x3x8x128xf32, #tpu.memory_space<vmem>>, vector<1x3x8x128xf32>
      tpu.vector_store %arg4[%c0_32, %c0_33, %c0_34, %c0_35], %51 {strides = array<i32>} : memref<1x3x8x128xf32, #tpu.memory_space<vmem>>, vector<1x3x8x128xf32>,
    } else {
    }
    %c1_i32 = arith.constant 1 : i32
    %3 = arith.muli %arg0, %c1_i32 : i32
    %4 = arith.addi %3, %arg1 : i32
    %c16_i32 = arith.constant 16 : i32
    %5 = arith.muli %4, %c16_i32 : i32
    %6 = tpu.iota {dimensions = array<i32: 0>} : vector<16x128xi32>
    %7 = vector.broadcast %5 : i32 to vector<16x128xi32>
    %8 = arith.addi %6, %7 : vector<16x128xi32>
    %9 = tpu.iota {dimensions = array<i32: 1>} : vector<16x128xi32>
    %c128_i32 = arith.constant 128 : i32
    %10 = vector.broadcast %c128_i32 : i32 to vector<16x128xi32>
    %11 = arith.muli %8, %10 : vector<16x128xi32>
    %12 = arith.addi %11, %9 : vector<16x128xi32>
    %c2048_i32 = arith.constant 2048 : i32
    %13 = vector.broadcast %c2048_i32 : i32 to vector<16x128xi32>
    %14 = arith.cmpi slt, %12, %13 : vector<16x128xi32>
    %c0 = arith.constant 0 : index
    %c0_1 = arith.constant 0 : index
    %15 = vector.load %arg2[%c0, %c0_1] : memref<16x128xf32, #tpu.memory_space<vmem>>, vector<16x128xf32>
    %16 = arith.negf %15 : vector<16x128xf32>
    %17 = math.exp %16 : vector<16x128xf32>
    %cst = arith.constant 1.000000e+00 : f32
    %18 = vector.broadcast %cst : f32 to vector<16x128xf32>
    %19 = arith.addf %18, %17 : vector<16x128xf32>
    %20 = arith.divf %18, %19 : vector<16x128xf32>
    %c0_2 = arith.constant 0 : index
    %c0_3 = arith.constant 0 : index
    %21 = vector.load %arg3[%c0_2, %c0_3] : memref<16x128xf32, #tpu.memory_space<vmem>>, vector<16x128xf32>
    %cst_4 = arith.constant 0.000000e+00 : f32
    %22 = vector.broadcast %cst_4 : f32 to vector<16x128xf32>
    %23 = arith.select %14, %20, %22 : vector<16x128xi1>, vector<16x128xf32>
    %cst_5 = arith.constant 0.000000e+00 : f32
    %24 = vector.broadcast %cst_5 : f32 to vector<16x128xf32>
    %25 = arith.select %14, %21, %24 : vector<16x128xi1>, vector<16x128xf32>
    %c0_6 = arith.constant 0 : index
    %c0_7 = arith.constant 0 : index
    %c0_8 = arith.constant 0 : index
    %c0_9 = arith.constant 0 : index
    %26 = vector.load %arg4[%c0_6, %c0_7, %c0_8, %c0_9] : memref<1x3x8x128xf32, #tpu.memory_space<vmem>>, vector<1x1x8x128xf32>
    %27 = vector.shape_cast %26 : vector<1x1x8x128xf32> to vector<8x128xf32>
    %28 = arith.mulf %23, %25 : vector<16x128xf32>
    %29 = vector.shape_cast %28 : vector<16x128xf32> to vector<2x8x128xf32>
    %cst_10 = arith.constant dense<0.000000e+00> : vector<8x128xf32>
    %30 = vector.multi_reduction <add>, %29, %cst_10 [0] : vector<2x8x128xf32> to vector<8x128xf32>
    %31 = arith.addf %27, %30 : vector<8x128xf32>
    %c0_11 = arith.constant 0 : index
    %c0_12 = arith.constant 0 : index
    %c0_13 = arith.constant 0 : index
    %c0_14 = arith.constant 0 : index
    %32 = vector.load %arg4[%c0_11, %c0_12, %c0_13, %c0_14] : memref<1x3x8x128xf32, #tpu.memory_space<vmem>>, vector<1x1x8x128xf32>
    %33 = vector.shape_cast %32 : vector<1x1x8x128xf32> to vector<8x128xf32>
    %34 = vector.shape_cast %31 : vector<8x128xf32> to vector<1x1x8x128xf32>
    tpu.vector_store %arg4[%c0_11, %c0_12, %c0_13, %c0_14], %34 {strides = array<i32>} : memref<1x3x8x128xf32, #tpu.memory_space<vmem>>, vector<1x1x8x128xf32>,
    %c0_15 = arith.constant 0 : index
    %c1 = arith.constant 1 : index
    %c0_16 = arith.constant 0 : index
    %c0_17 = arith.constant 0 : index
    %35 = vector.load %arg4[%c0_15, %c1, %c0_16, %c0_17] : memref<1x3x8x128xf32, #tpu.memory_space<vmem>>, vector<1x1x8x128xf32>
    %36 = vector.shape_cast %35 : vector<1x1x8x128xf32> to vector<8x128xf32>
    %37 = vector.shape_cast %23 : vector<16x128xf32> to vector<2x8x128xf32>
    %cst_18 = arith.constant dense<0.000000e+00> : vector<8x128xf32>
    %38 = vector.multi_reduction <add>, %37, %cst_18 [0] : vector<2x8x128xf32> to vector<8x128xf32>
    %39 = arith.addf %36, %38 : vector<8x128xf32>
    %c0_19 = arith.constant 0 : index
    %c1_20 = arith.constant 1 : index
    %c0_21 = arith.constant 0 : index
    %c0_22 = arith.constant 0 : index
    %40 = vector.load %arg4[%c0_19, %c1_20, %c0_21, %c0_22] : memref<1x3x8x128xf32, #tpu.memory_space<vmem>>, vector<1x1x8x128xf32>
    %41 = vector.shape_cast %40 : vector<1x1x8x128xf32> to vector<8x128xf32>
    %42 = vector.shape_cast %39 : vector<8x128xf32> to vector<1x1x8x128xf32>
    tpu.vector_store %arg4[%c0_19, %c1_20, %c0_21, %c0_22], %42 {strides = array<i32>} : memref<1x3x8x128xf32, #tpu.memory_space<vmem>>, vector<1x1x8x128xf32>,
    %c0_23 = arith.constant 0 : index
    %c2 = arith.constant 2 : index
    %c0_24 = arith.constant 0 : index
    %c0_25 = arith.constant 0 : index
    %43 = vector.load %arg4[%c0_23, %c2, %c0_24, %c0_25] : memref<1x3x8x128xf32, #tpu.memory_space<vmem>>, vector<1x1x8x128xf32>
    %44 = vector.shape_cast %43 : vector<1x1x8x128xf32> to vector<8x128xf32>
    %45 = vector.shape_cast %25 : vector<16x128xf32> to vector<2x8x128xf32>
    %cst_26 = arith.constant dense<0.000000e+00> : vector<8x128xf32>
    %46 = vector.multi_reduction <add>, %45, %cst_26 [0] : vector<2x8x128xf32> to vector<8x128xf32>
    %47 = arith.addf %44, %46 : vector<8x128xf32>
    %c0_27 = arith.constant 0 : index
    %c2_28 = arith.constant 2 : index
    %c0_29 = arith.constant 0 : index
    %c0_30 = arith.constant 0 : index
    %48 = vector.load %arg4[%c0_27, %c2_28, %c0_29, %c0_30] : memref<1x3x8x128xf32, #tpu.memory_space<vmem>>, vector<1x1x8x128xf32>
    %49 = vector.shape_cast %48 : vector<1x1x8x128xf32> to vector<8x128xf32>
    %50 = vector.shape_cast %47 : vector<8x128xf32> to vector<1x1x8x128xf32>
    tpu.vector_store %arg4[%c0_27, %c2_28, %c0_29, %c0_30], %50 {strides = array<i32>} : memref<1x3x8x128xf32, #tpu.memory_space<vmem>>, vector<1x1x8x128xf32>,
    return
  }
  func.func @transform_0(%arg0: i32, %arg1: i32) -> (i32, i32) {
    %c1_i32 = arith.constant 1 : i32
    %0 = arith.muli %arg0, %c1_i32 : i32
    %1 = arith.addi %0, %arg1 : i32
    %c0_i32 = arith.constant 0 : i32
    %2 = arith.minsi %1, %c0_i32 : i32
    %c0_i32_0 = arith.constant 0 : i32
    %c0_i32_1 = arith.constant 0 : i32
    return %2, %c0_i32_0 : i32, i32
  }
  func.func @transform_1(%arg0: i32, %arg1: i32) -> (i32, i32) {
    %c1_i32 = arith.constant 1 : i32
    %0 = arith.muli %arg0, %c1_i32 : i32
    %1 = arith.addi %0, %arg1 : i32
    %c0_i32 = arith.constant 0 : i32
    %2 = arith.minsi %1, %c0_i32 : i32
    %c0_i32_0 = arith.constant 0 : i32
    %c0_i32_1 = arith.constant 0 : i32
    return %2, %c0_i32_0 : i32, i32
  }
  func.func @transform_2(%arg0: i32, %arg1: i32) -> (i32, i32, i32, i32) {
    %c0_i32 = arith.constant 0 : i32
    %c0_i32_0 = arith.constant 0 : i32
    %c0_i32_1 = arith.constant 0 : i32
    %c0_i32_2 = arith.constant 0 : i32
    return %arg0, %c0_i32, %c0_i32_0, %c0_i32_1 : i32, i32, i32, i32
  }
}

</mosaic_0001>

<llo_original>
// kernel: tpu_custom_call.1
$region0: #{tpu_custom_call.1}
  #allocation0 [shape = 'u32[]', space=smem, size = 0x4, offset = 0x4, fixed_abs, tag = 'smem constant byte address 0x4 - core index']
  #allocation1 [shape = 'u32[144,128]{1,0:T(1,128)}', space=vmem, size = 0x12000, scoped, tag = 'internal scratch']
  %s0 = inlined_call_operand.hbm [shape: f32[16,128], index: 0, kind: input, shape index: {}]
  %s1 = inlined_call_operand.hbm [shape: f32[16,128], index: 1, kind: input, shape index: {}]
  %s2 = inlined_call_operand.hbm [shape: f32[1,3,8,128], index: 2, kind: output, shape index: {}]
  %s3 = sld [smem:[#allocation0]]
  $region30: #{tpu_custom_call.1} parent=0
    _
  %s5 = ssub.s32 1, %s3
  %s6 = scalar_select 0, %s5, %s3
  $region1: #{tpu_custom_call.1} parent=0
    #allocation2 [shape = 'u8[8192]{0}', space=vmem, size = 0x2000, scoped, tag = 'input window, operand 0, single buffered']
    #allocation3 [shape = 's32[1]{0}', space=sflag, size = 0x4, scoped, tag = 'scoped memory for tpu_custom_call.1']
    #allocation4 [shape = 's32[1]{0}', space=sflag, size = 0x4, scoped, tag = 'scoped memory for tpu_custom_call.1']
    #allocation5 [shape = 'u8[8192]{0}', space=vmem, size = 0x2000, scoped, tag = 'input window, operand 1, single buffered']
    #allocation6 [shape = 's32[1]{0}', space=sflag, size = 0x4, scoped, tag = 'scoped memory for tpu_custom_call.1']
    #allocation7 [shape = 'u8[12288]{0}', space=vmem, size = 0x3000, scoped, tag = 'output window, operand 0, single buffered']
    %7 = vsyncpa [#allocation3], 0
    %8 = vsyncpa [#allocation6], 0
    %9 = vsyncpa [#allocation4], 0
    // Predicated region
    $region2: #{tpu_custom_call.1} parent=1 // pred_check
      _
    $region3: #{tpu_custom_call.1} parent=1 // pred_check_branch
      %11 = sbr.rel (0) target = $region5
    $region4: #{tpu_custom_call.1} parent=1 // pred_region
      %s12 = sadd.s32 0, 0
      %p13 = scmp.lt.s32.totalorder %s12, 0
      %s14 = scalar_select %p13, %s12, 0
      %s15 = smul.u32 2, %s14
      %s17 = ssub.s32 256, 256
      %18 = vsyncadd [#allocation3], %s17
      %s19 = smul.addr %s15, 128
      %s20 = scalar_lea.hbm %s0, %s19
      %s21 = sshll.u32 [#allocation2], 4
      %s22 = int_to_ptr.vmem [resolvable:$true] %s21
      %27 = dma.hbm_to_vmem [thread:$0]  %s20, 256, %s22, [#allocation3], 128, 128, 8
    $region5: #{tpu_custom_call.1} parent=1 // pred_fallthru
      _
    // Predicated region
    $region6: #{tpu_custom_call.1} parent=1 // pred_check
      _
    $region7: #{tpu_custom_call.1} parent=1 // pred_check_branch
      %29 = sbr.rel (0) target = $region9
    $region8: #{tpu_custom_call.1} parent=1 // pred_region
      %s30 = sadd.s32 0, 0
      %p31 = scmp.lt.s32.totalorder %s30, 0
      %s32 = scalar_select %p31, %s30, 0
      %s33 = smul.u32 2, %s32
      %s35 = ssub.s32 256, 256
      %36 = vsyncadd [#allocation6], %s35
      %s37 = smul.addr %s33, 128
      %s38 = scalar_lea.hbm %s1, %s37
      %s39 = sshll.u32 [#allocation5], 4
      %s40 = int_to_ptr.vmem [resolvable:$true] %s39
      %45 = dma.hbm_to_vmem [thread:$0]  %s38, 256, %s40, [#allocation6], 128, 128, 8
    $region9: #{tpu_custom_call.1} parent=1 // pred_fallthru
      _
    // Predicated region
    $region10: #{tpu_custom_call.1} parent=1 // pred_check
      _
    $region11: #{tpu_custom_call.1} parent=1 // pred_check_branch
      %47 = sbr.rel (0) target = $region13
    $region12: #{tpu_custom_call.1} parent=1 // pred_region
      %48 = dma.done [#allocation3], 256
    $region13: #{tpu_custom_call.1} parent=1 // pred_fallthru
      _
    // Predicated region
    $region14: #{tpu_custom_call.1} parent=1 // pred_check
      _
    $region15: #{tpu_custom_call.1} parent=1 // pred_check_branch
      %50 = sbr.rel (0) target = $region17
    $region16: #{tpu_custom_call.1} parent=1 // pred_region
      %51 = dma.done [#allocation6], 256
    $region17: #{tpu_custom_call.1} parent=1 // pred_fallthru
      _
    %s52 = sadd.s32 0, 0
    %p53 = scmp.lt.s32.totalorder %s52, 0
    %s54 = scalar_select %p53, %s52, 0
    %s55 = smul.u32 2, %s54
    %s56 = sadd.s32 0, 0
    %p57 = scmp.lt.s32.totalorder %s56, 0
    %s58 = scalar_select %p57, %s56, 0
    %s59 = smul.u32 2, %s58
    %p60 = scmp.eq.s32.totalorder 0, 0
    // Predicated region
    $region18: #{tpu_custom_call.1} parent=1 // pred_check
      %p61 = pneg %p60
    $region19: #{tpu_custom_call.1} parent=1 // pred_check_branch
      %63 = sbr.rel (%p61) target = $region21
    $region20: #{tpu_custom_call.1} parent=1 // pred_region
      %64 = vst [vmem:[#allocation7] sm:$0xff] 0.0
      %65 = vst [vmem:[#allocation7 + $0x8] sm:$0xff] 0.0
      %66 = vst [vmem:[#allocation7 + $0x10] sm:$0xff] 0.0
    $region21: #{tpu_custom_call.1} parent=1 // pred_fallthru
      _
    %s67 = sadd.s32 0, 0
    %s68 = smul.u32 %s67, 16
    %v69 = vlaneseq
    %v70 = vshrl.u32 %v69, 7
    %v71 = vadd.s32 %v70, 8
    %v72 = vstv %s68
    %v73 = vadd.s32 %v70, %v72
    %v74 = vadd.s32 %v71, %v72
    %v75 = vlaneseq
    %v76 = vand.u32 %v75, 127
    %v77 = vmul.u32 %v73, 128
    %v78 = vmul.u32 %v74, 128
    %v79 = vadd.s32 %v77, %v76
    %v80 = vadd.s32 %v78, %v76
    %vm81 = vcmp.lt.s32.totalorder %v79, 2048
    %vm82 = vcmp.lt.s32.totalorder %v80, 2048
    %v83 = vld [vmem:[#allocation2] sm:$0xff]
    %v84 = vld [vmem:[#allocation2 + $0x8] sm:$0xff]
    %v85 = vxor.u32 %v83, 2147483648
    %v86 = vxor.u32 %v84, 2147483648
    %v87 = vmul.f32 %v85, 1.442695
    %v88 = vpow.pop %v87
    %v89 = vmul.f32 %v86, 1.442695
    %v90 = vpow.pop %v89
    %v91 = vadd.f32 %v88, 1.0
    %v92 = vadd.f32 %v90, 1.0
    %v93 = vrcp.pop %v91
    %v94 = vmul.f32 1.0, %v93
    %v95 = vrcp.pop %v92
    %v96 = vmul.f32 1.0, %v95
    %v97 = vld [vmem:[#allocation5] sm:$0xff]
    %v98 = vld [vmem:[#allocation5 + $0x8] sm:$0xff]
    %v99 = vsel %vm81, %v94, 0.0
    %v100 = vsel %vm82, %v96, 0.0
    %v101 = vsel %vm81, %v97, 0.0
    %v102 = vsel %vm82, %v98, 0.0
    %v103 = vld [vmem:[#allocation7] sm:$0xff]
    %v104 = vmul.f32 %v99, %v101
    %v105 = vmul.f32 %v100, %v102
    %v106 = vadd.f32 %v104, %v105
    %v107 = vadd.f32 %v103, %v106
    %108 = vst [vmem:[#allocation7] sm:$0xff] %v107
    %s109 = scalar_lea.vmem [#allocation7], 8
    %v110 = vld [vmem:[%s109] sm:$0xff]
    %v111 = vadd.f32 %v99, %v100
    %v112 = vadd.f32 %v110, %v111
    %113 = vst [vmem:[%s109] sm:$0xff] %v112
    %s114 = scalar_lea.vmem [#allocation7], 16
    %v115 = vld [vmem:[%s114] sm:$0xff]
    %v116 = vadd.f32 %v101, %v102
    %v117 = vadd.f32 %v115, %v116
    %118 = vst [vmem:[%s114] sm:$0xff] %v117
    // Predicated region
    $region22: #{tpu_custom_call.1} parent=1 // pred_check
      _
    $region23: #{tpu_custom_call.1} parent=1 // pred_check_branch
      %120 = sbr.rel (0) target = $region25
    $region24: #{tpu_custom_call.1} parent=1 // pred_region
      %s122 = ssub.s32 384, 384
      %123 = vsyncadd [#allocation4], %s122
      %s124 = sshll.u32 [#allocation7], 4
      %s125 = int_to_ptr.vmem [resolvable:$true] %s124
      %130 = dma.vmem_to_hbm [thread:$0]  %s125, 384, %s2, [#allocation4], 128, 128, 8
    $region25: #{tpu_custom_call.1} parent=1 // pred_fallthru
      _
    // Predicated region
    $region26: #{tpu_custom_call.1} parent=1 // pred_check
      _
    $region27: #{tpu_custom_call.1} parent=1 // pred_check_branch
      %132 = sbr.rel (0) target = $region29
    $region28: #{tpu_custom_call.1} parent=1 // pred_region
      %133 = dma.done [#allocation4], 384
    $region29: #{tpu_custom_call.1} parent=1 // pred_fallthru
      _
    %134 = vsyncpa [#allocation3], 1
    %135 = vsyncpa [#allocation6], 1
    %136 = vsyncpa [#allocation4], 1

</llo_original>
